<compile_context>
chip_gen: v7x
topology: tpu7x:2x2x1
jax: 0.10.0
libtpu: 0.0.40
codegen_flags: <defaults>
</compile_context>

<pallas_src>
import functools

import numpy as np
import jax
import jax.numpy as jnp
from jax import lax
from jax.experimental import pallas as pl
from jax.experimental.pallas import tpu as pltpu

LANE = 128          # TPU lane width (last-dim granularity)
MAX_TILE = 512      # cap on node-row / contraction tiles (fits all VMEM budgets)


# --------------------------------------------------------------------------
# helpers
# --------------------------------------------------------------------------
def _round_up(x, m):
    return ((x + m - 1) // m) * m


def _pick_tile(n_pad, cap=MAX_TILE):
    """Largest multiple of 128 that divides n_pad and is <= cap."""
    best = LANE
    t = LANE
    while t <= min(cap, n_pad):
        if n_pad % t == 0:
            best = t
        t += LANE
    return best


def _pad2(a, rows, cols):
    return jnp.pad(a, ((0, rows - a.shape[0]), (0, cols - a.shape[1])))


# --------------------------------------------------------------------------
# SAGEConv layer:  out = mean_{j in N(i)} x_j @ W_l + b + x_i @ W_r
# expressed as a tiled (A_norm @ X) accumulation + one fused weight matmul.
# --------------------------------------------------------------------------
def _sage_kernel(adj_ref, xk_ref, xi_ref, w_ref, b_ref, o_ref, acc_ref, *,
                 normalize):
    k = pl.program_id(1)

    @pl.when(k == 0)
    def _():
        acc_ref[...] = jnp.zeros_like(acc_ref)

    # neighbor-mean aggregation tile:  acc += A[i, k] @ X[k]   (bf16 -> f32)
    acc_ref[...] += jnp.dot(adj_ref[...], xk_ref[...],
                            preferred_element_type=jnp.float32)

    @pl.when(k == pl.num_programs(1) - 1)
    def _():
        # fused root/neighbor transform:  [agg | x_i] @ [W_l ; W_r] + b
        x_cat = jnp.concatenate(
            [acc_ref[...].astype(jnp.bfloat16), xi_ref[...]], axis=1)
        out = jnp.dot(x_cat, w_ref[...],
                      preferred_element_type=jnp.float32) + b_ref[...]
        if normalize:  # F.normalize(out, p=2, dim=-1)
            ss = jnp.sum(out * out, axis=1, keepdims=True)
            out = out * lax.rsqrt(jnp.maximum(ss, 1e-24))
        o_ref[...] = out


def sage_conv(adj_p, x_p, w_cat, b, *, normalize=False):
    n_pad, f_pad = x_p.shape
    fout_pad = w_cat.shape[1]
    tm = _pick_tile(n_pad)
    tk = _pick_tile(n_pad)
    grid = (n_pad // tm, n_pad // tk)

    flops = 2 * n_pad * n_pad * f_pad + 2 * n_pad * (2 * f_pad) * fout_pad
    bytes_accessed = (n_pad * n_pad * 2 + 2 * n_pad * f_pad * 2
                      + 2 * f_pad * fout_pad * 2 + n_pad * fout_pad * 4)

    kernel = functools.partial(_sage_kernel, normalize=normalize)
    return pl.pallas_call(
        kernel,
        out_shape=jax.ShapeDtypeStruct((n_pad, fout_pad), jnp.float32),
        grid_spec=pltpu.PrefetchScalarGridSpec(
            num_scalar_prefetch=0,
            grid=grid,
            in_specs=[
                pl.BlockSpec((tm, tk), lambda i, k: (i, k)),      # adjacency
                pl.BlockSpec((tk, f_pad), lambda i, k: (k, 0)),   # x for A@x
                pl.BlockSpec((tm, f_pad), lambda i, k: (i, 0)),   # x (root term)
                pl.BlockSpec((2 * f_pad, fout_pad), lambda i, k: (0, 0)),
                pl.BlockSpec((1, fout_pad), lambda i, k: (0, 0)),
            ],
            out_specs=pl.BlockSpec((tm, fout_pad), lambda i, k: (i, 0)),
            scratch_shapes=[pltpu.VMEM((tm, f_pad), jnp.float32)],
        ),
        compiler_params=pltpu.CompilerParams(
            dimension_semantics=("parallel", "arbitrary")),
        cost_estimate=pl.CostEstimate(
            flops=flops,
            transcendentals=n_pad if normalize else 0,
            bytes_accessed=bytes_accessed),
    )(adj_p, x_p, x_p, w_cat, b)


# --------------------------------------------------------------------------
# MLP head: fc1 + ReLU + fc2 + softmax(dim=1), lane-dense (padded to 128)
# --------------------------------------------------------------------------
def _head_kernel(xe_ref, w1_ref, b1_ref, w2_ref, b2_ref, y_ref, *, n_classes):
    h = jnp.dot(xe_ref[...], w1_ref[...],
                preferred_element_type=jnp.float32) + b1_ref[...]
    h = jnp.maximum(h, 0.0)
    logits = jnp.dot(h.astype(jnp.bfloat16), w2_ref[...],
                     preferred_element_type=jnp.float32) + b2_ref[...]
    # softmax over real classes only (padded lanes -> 0)
    col = lax.broadcasted_iota(jnp.int32, logits.shape, 1)
    logits = jnp.where(col < n_classes, logits, jnp.float32(-1e30))
    m = jnp.max(logits, axis=1, keepdims=True)
    e = jnp.exp(logits - m)
    y_ref[...] = e * pl.reciprocal(jnp.sum(e, axis=1, keepdims=True),
                                   approx=True)


def mlp_head(xe_p, w1, b1, w2, b2, *, n_classes=2):
    rows, d_pad = xe_p.shape
    h_pad = w1.shape[1]
    c_pad = w2.shape[1]
    tr = _pick_tile(rows)
    kernel = functools.partial(_head_kernel, n_classes=n_classes)
    return pl.pallas_call(
        kernel,
        out_shape=jax.ShapeDtypeStruct((rows, c_pad), jnp.float32),
        grid_spec=pltpu.PrefetchScalarGridSpec(
            num_scalar_prefetch=0,
            grid=(rows // tr,),
            in_specs=[
                pl.BlockSpec((tr, d_pad), lambda i: (i, 0)),
                pl.BlockSpec((d_pad, h_pad), lambda i: (0, 0)),
                pl.BlockSpec((1, h_pad), lambda i: (0, 0)),
                pl.BlockSpec((h_pad, c_pad), lambda i: (0, 0)),
                pl.BlockSpec((1, c_pad), lambda i: (0, 0)),
            ],
            out_specs=pl.BlockSpec((tr, c_pad), lambda i: (i, 0)),
        ),
        compiler_params=pltpu.CompilerParams(
            dimension_semantics=("parallel",)),
    )(xe_p, w1, b1, w2, b2)


# --------------------------------------------------------------------------
# Parameter init (torch nn.Linear-style uniform init), padded/fused for TPU
# --------------------------------------------------------------------------
def _init_linear(key, fan_in, fan_out, bias=True):
    kw, kb = jax.random.split(key)
    bound = 1.0 / float(np.sqrt(fan_in))
    w = jax.random.uniform(kw, (fan_in, fan_out), jnp.float32, -bound, bound)
    b = (jax.random.uniform(kb, (1, fan_out), jnp.float32, -bound, bound)
         if bias else None)
    return w, b


def init_params(key, in_features, out_features):
    ks = jax.random.split(key, 6)
    fin_pad = _round_up(in_features, LANE)
    fout_pad = _round_up(out_features, LANE)
    d = out_features * 2 + 1
    d_pad = _round_up(d, LANE)
    c_pad = _round_up(2, LANE)

    # SAGEConv 1: lin_l (neighbors, bias) + lin_r (root, no bias)
    w_l1, b1 = _init_linear(ks[0], in_features, out_features)
    w_r1, _ = _init_linear(ks[1], in_features, out_features, bias=False)
    # SAGEConv 2
    w_l2, b2 = _init_linear(ks[2], out_features, out_features)
    w_r2, _ = _init_linear(ks[3], out_features, out_features, bias=False)
    # head
    fc1_w, fc1_b = _init_linear(ks[4], d, out_features)
    fc2_w, fc2_b = _init_linear(ks[5], out_features, 2)

    return {
        'in_features': in_features,
        'out_features': out_features,
        # fused [W_l ; W_r], zero-padded to lane width, bf16 for the MXU
        'agg1_w': jnp.concatenate(
            [_pad2(w_l1, fin_pad, fout_pad),
             _pad2(w_r1, fin_pad, fout_pad)], axis=0).astype(jnp.bfloat16),
        'agg1_b': _pad2(b1, 1, fout_pad),
        'agg2_w': jnp.concatenate(
            [_pad2(w_l2, fout_pad, fout_pad),
             _pad2(w_r2, fout_pad, fout_pad)], axis=0).astype(jnp.bfloat16),
        'agg2_b': _pad2(b2, 1, fout_pad),
        'fc1_w': _pad2(fc1_w, d_pad, fout_pad).astype(jnp.bfloat16),
        'fc1_b': _pad2(fc1_b, 1, fout_pad),
        'fc2_w': _pad2(fc2_w, fout_pad, c_pad).astype(jnp.bfloat16),
        'fc2_b': _pad2(fc2_b, 1, c_pad),
    }


# --------------------------------------------------------------------------
# Forward glue
# --------------------------------------------------------------------------
def build_adj_norm(edges, num_nodes, n_pad):
    """Row-normalized dense adjacency (bf16): A[i, j] = 1/deg(i) per edge j->i.
    Padded rows/cols are zero so they never contribute."""
    # TODO(synk): for large sparse graphs replace the dense O(N^2) adjacency
    # with a scalar-prefetched neighbor-list gather (block-sparse) kernel.
    src, dst = edges[0], edges[1]
    a = jnp.zeros((n_pad, n_pad), jnp.float32).at[dst, src].add(1.0)
    deg = jnp.sum(a, axis=1, keepdims=True)
    return (a / jnp.maximum(deg, 1.0)).astype(jnp.bfloat16)


def gnn_forward(params, x, edges, edge_feature, batch, *, normalize=False):
    num_nodes, in_features = x.shape
    out_features = params['out_features']
    fin_pad = _round_up(in_features, LANE)
    n_pad = _round_up(num_nodes, LANE)

    adj_p = build_adj_norm(edges, num_nodes, n_pad)
    x_p = _pad2(x, n_pad, fin_pad).astype(jnp.bfloat16)

    # two SAGEConv layers (tiled Pallas kernels, bf16 MXU, f32 accumulation)
    x1 = sage_conv(adj_p, x_p, params['agg1_w'], params['agg1_b'],
                   normalize=normalize)
    x2 = sage_conv(adj_p, x1.astype(jnp.bfloat16), params['agg2_w'],
                   params['agg2_b'], normalize=normalize)
    x2 = x2[:num_nodes, :out_features]

    # N = sum over graphs of (#nodes in graph)^2   (matches the torch loop)
    b_np = np.asarray(batch)
    n_rows = int(sum(int(np.sum(b_np == v)) ** 2 for v in np.unique(b_np)))
    e_cnt = edges.shape[1]

    # x_edges[k] = concat(x2[src_k], x2[dst_k], edge_feature[k]); rows E..N-1 = 0
    # TODO(synk): fuse this edge gather + MLP head with the conv layers via
    # scalar-prefetched indices so x2 never round-trips through HBM.
    xe = jnp.concatenate(
        [x2[edges[0]], x2[edges[1]],
         edge_feature[:, None].astype(jnp.float32)], axis=1)
    d_pad = _round_up(xe.shape[1], LANE)
    rows_pad = _round_up(max(n_rows, e_cnt), LANE)
    xe_p = _pad2(xe, rows_pad, d_pad).astype(jnp.bfloat16)

    y_p = mlp_head(xe_p, params['fc1_w'], params['fc1_b'],
                   params['fc2_w'], params['fc2_b'], n_classes=2)
    return y_p[:n_rows, :2]


# --------------------------------------------------------------------------
if __name__ == "__main__":
    key = jax.random.PRNGKey(0)
    k_param, k_x, k_ef = jax.random.split(key, 3)

    in_features = 4
    out_features = 32          # model_params['model_out_features']
    normalize = False          # model_params['model_normalize']

    # Two graphs of 4 nodes each; complete graph with self-loops per graph,
    # so the number of edges E equals N = sum(count^2).
    n_graphs, nodes_per_graph = 2, 4
    num_nodes = n_graphs * nodes_per_graph
    batch = np.repeat(np.arange(n_graphs), nodes_per_graph).astype(np.int32)

    edge_list = []
    off = 0
    for _ in range(n_graphs):
        for i in range(nodes_per_graph):
            for j in range(nodes_per_graph):
                edge_list.append((off + i, off + j))
        off += nodes_per_graph
    edges = jnp.asarray(np.array(edge_list, dtype=np.int32).T)      # (2, E)
    e_cnt = edges.shape[1]

    x = jax.random.normal(k_x, (num_nodes, in_features), jnp.float32)
    edge_feature = jax.random.normal(k_ef, (e_cnt,), jnp.float32)

    params = init_params(k_param, in_features, out_features)

    y = gnn_forward(params, x, edges, edge_feature, batch, normalize=normalize)
    y = jax.block_until_ready(y)

    n_rows = int(sum(int(np.sum(batch == v)) ** 2 for v in np.unique(batch)))
    assert y.shape == (n_rows, 2)
    assert bool(jnp.all(jnp.isfinite(y)))
    # softmax rows sum to ~1 (approx EUP reciprocal in the head kernel)
    assert bool(jnp.allclose(jnp.sum(y, axis=1), 1.0, atol=1e-2))
    print("KERNEL_OK")
</pallas_src>

<mosaic_0001>
module attributes {stable_mosaic.version = 11 : i64} {
  func.func @_sage_kernel(%arg0: i32, %arg1: i32, %arg2: memref<128x128xbf16, #tpu.memory_space<vmem>>, %arg3: memref<128x128xbf16, #tpu.memory_space<vmem>>, %arg4: memref<128x128xbf16, #tpu.memory_space<vmem>>, %arg5: memref<256x128xbf16, #tpu.memory_space<vmem>>, %arg6: memref<1x128xf32, #tpu.memory_space<vmem>>, %arg7: memref<128x128xf32, #tpu.memory_space<vmem>>, %arg8: memref<128x128xf32, #tpu.memory_space<vmem>>) attributes {dimension_semantics = [#tpu.dimension_semantics<parallel>, #tpu.dimension_semantics<arbitrary>], iteration_bounds = array<i64: 1, 1>, scalar_prefetch = 0 : i64, scratch_operands = 1 : i64, tpu.core_type = #tpu.core_type<tc>, window_params = [{transform_indices = @transform_0, window_bounds = array<i64: 128, 128>}, {transform_indices = @transform_1, window_bounds = array<i64: 128, 128>}, {transform_indices = @transform_2, window_bounds = array<i64: 128, 128>}, {pipeline_mode = #tpu.pipeline_mode<synchronous>, transform_indices = @transform_3, window_bounds = array<i64: 256, 128>}, {pipeline_mode = #tpu.pipeline_mode<synchronous>, transform_indices = @transform_4, window_bounds = array<i64: 1, 128>}, {transform_indices = @transform_5, window_bounds = array<i64: 128, 128>}]} {
    %c0_i32 = arith.constant 0 : i32
    %0 = arith.cmpi eq, %arg1, %c0_i32 : i32
    %1 = arith.extui %0 : i1 to i32
    %c0_i32_0 = arith.constant 0 : i32
    %2 = arith.cmpi ne, %1, %c0_i32_0 : i32
    scf.if %2 {
      %cst_10 = arith.constant 0.000000e+00 : f32
      %12 = vector.broadcast %cst_10 : f32 to vector<128x128xf32>
      %c0_11 = arith.constant 0 : index
      %c0_12 = arith.constant 0 : index
      %13 = vector.load %arg8[%c0_11, %c0_12] : memref<128x128xf32, #tpu.memory_space<vmem>>, vector<128x128xf32>
      tpu.vector_store %arg8[%c0_11, %c0_12], %12 {strides = array<i32>} : memref<128x128xf32, #tpu.memory_space<vmem>>, vector<128x128xf32>,
    } else {
    }
    %c0 = arith.constant 0 : index
    %c0_1 = arith.constant 0 : index
    %3 = vector.load %arg8[%c0, %c0_1] : memref<128x128xf32, #tpu.memory_space<vmem>>, vector<128x128xf32>
    %c0_2 = arith.constant 0 : index
    %c0_3 = arith.constant 0 : index
    %4 = vector.load %arg2[%c0_2, %c0_3] : memref<128x128xbf16, #tpu.memory_space<vmem>>, vector<128x128xbf16>
    %c0_4 = arith.constant 0 : index
    %c0_5 = arith.constant 0 : index
    %5 = vector.load %arg3[%c0_4, %c0_5] : memref<128x128xbf16, #tpu.memory_space<vmem>>, vector<128x128xbf16>
    %cst = arith.constant dense<0.000000e+00> : vector<128x128xf32>
    %6 = tpu.matmul %4, %5, %cst {dimension_numbers = #tpu.dot_dimension_numbers<[1], [0], [0], [1], [0, 0, 1, 1], [], []>} : vector<128x128xbf16>, vector<128x128xbf16>, vector<128x128xf32> -> vector<128x128xf32>
    %7 = arith.addf %3, %6 : vector<128x128xf32>
    %c0_6 = arith.constant 0 : index
    %c0_7 = arith.constant 0 : index
    %8 = vector.load %arg8[%c0_6, %c0_7] : memref<128x128xf32, #tpu.memory_space<vmem>>, vector<128x128xf32>
    tpu.vector_store %arg8[%c0_6, %c0_7], %7 {strides = array<i32>} : memref<128x128xf32, #tpu.memory_space<vmem>>, vector<128x128xf32>,
    %c0_i32_8 = arith.constant 0 : i32
    %9 = arith.cmpi eq, %arg1, %c0_i32_8 : i32
    %10 = arith.extui %9 : i1 to i32
    %c0_i32_9 = arith.constant 0 : i32
    %11 = arith.cmpi ne, %10, %c0_i32_9 : i32
    scf.if %11 {
      %c0_10 = arith.constant 0 : index
      %c0_11 = arith.constant 0 : index
      %12 = vector.load %arg8[%c0_10, %c0_11] : memref<128x128xf32, #tpu.memory_space<vmem>>, vector<128x128xf32>
      %13 = arith.truncf %12 : vector<128x128xf32> to vector<128x128xbf16>
      %c0_12 = arith.constant 0 : index
      %c0_13 = arith.constant 0 : index
      %14 = vector.load %arg4[%c0_12, %c0_13] : memref<128x128xbf16, #tpu.memory_space<vmem>>, vector<128x128xbf16>
      %15 = tpu.concatenate %13, %14 in 1 : vector<128x128xbf16>, vector<128x128xbf16> -> vector<128x256xbf16>
      %c0_14 = arith.constant 0 : index
      %c0_15 = arith.constant 0 : index
      %16 = vector.load %arg5[%c0_14, %c0_15] : memref<256x128xbf16, #tpu.memory_space<vmem>>, vector<256x128xbf16>
      %cst_16 = arith.constant dense<0.000000e+00> : vector<128x128xf32>
      %17 = tpu.matmul %15, %16, %cst_16 {dimension_numbers = #tpu.dot_dimension_numbers<[1], [0], [0], [1], [0, 0, 1, 1], [], []>} : vector<128x256xbf16>, vector<256x128xbf16>, vector<128x128xf32> -> vector<128x128xf32>
      %c0_17 = arith.constant 0 : index
      %c0_18 = arith.constant 0 : index
      %18 = vector.load %arg6[%c0_17, %c0_18] : memref<1x128xf32, #tpu.memory_space<vmem>>, vector<1x128xf32>
      %19 = vector.broadcast %18 : vector<1x128xf32> to vector<128x128xf32>
      %20 = arith.addf %17, %19 : vector<128x128xf32>
      %c0_19 = arith.constant 0 : index
      %c0_20 = arith.constant 0 : index
      %21 = vector.load %arg7[%c0_19, %c0_20] : memref<128x128xf32, #tpu.memory_space<vmem>>, vector<128x128xf32>
      tpu.vector_store %arg7[%c0_19, %c0_20], %20 {strides = array<i32>} : memref<128x128xf32, #tpu.memory_space<vmem>>, vector<128x128xf32>,
    } else {
    }
    return
  }
  func.func @transform_0(%arg0: i32, %arg1: i32) -> (i32, i32) {
    %c0_i32 = arith.constant 0 : i32
    return %arg0, %arg1 : i32, i32
  }
  func.func @transform_1(%arg0: i32, %arg1: i32) -> (i32, i32) {
    %c0_i32 = arith.constant 0 : i32
    %c0_i32_0 = arith.constant 0 : i32
    return %arg1, %c0_i32 : i32, i32
  }
  func.func @transform_2(%arg0: i32, %arg1: i32) -> (i32, i32) {
    %c0_i32 = arith.constant 0 : i32
    %c0_i32_0 = arith.constant 0 : i32
    return %arg0, %c0_i32 : i32, i32
  }
  func.func @transform_3(%arg0: i32, %arg1: i32) -> (i32, i32) {
    %c0_i32 = arith.constant 0 : i32
    %c0_i32_0 = arith.constant 0 : i32
    %c0_i32_1 = arith.constant 0 : i32
    return %c0_i32, %c0_i32_0 : i32, i32
  }
  func.func @transform_4(%arg0: i32, %arg1: i32) -> (i32, i32) {
    %c0_i32 = arith.constant 0 : i32
    %c0_i32_0 = arith.constant 0 : i32
    %c0_i32_1 = arith.constant 0 : i32
    return %c0_i32, %c0_i32_0 : i32, i32
  }
  func.func @transform_5(%arg0: i32, %arg1: i32) -> (i32, i32) {
    %c0_i32 = arith.constant 0 : i32
    %c0_i32_0 = arith.constant 0 : i32
    return %arg0, %c0_i32 : i32, i32
  }
}

</mosaic_0001>

<llo_original>
// kernel: tpu_custom_call.1
$region0: #{tpu_custom_call.1}
  #allocation0 [shape = 'u32[]', space=smem, size = 0x4, offset = 0x4, fixed_abs, tag = 'smem constant byte address 0x4 - core index']
  #allocation1 [shape = 'u32[144,128]{1,0:T(1,128)}', space=vmem, size = 0x12000, scoped, tag = 'internal scratch']
  #allocation2 [shape = 'f32[128,128]{1,0:T(8,128)}', space=vmem, size = 0x10000, scoped, tag = 'scratch operand']
  %s0 = inlined_call_operand.hbm [shape: bf16[128,128], index: 0, kind: input, shape index: {}]
  %s1 = inlined_call_operand.hbm [shape: bf16[128,128], index: 1, kind: input, shape index: {}]
  %s2 = inlined_call_operand.hbm [shape: bf16[128,128], index: 2, kind: input, shape index: {}]
  %s3 = inlined_call_operand.hbm [shape: bf16[256,128], index: 3, kind: input, shape index: {}]
  %s4 = inlined_call_operand.vmem [shape: f32[1,128], index: 4, kind: input, shape index: {}]
  %s5 = inlined_call_operand.hbm [shape: f32[128,128], index: 5, kind: output, shape index: {}]
  %s6 = sld [smem:[#allocation0]]
  $region54: #{tpu_custom_call.1} parent=0
    _
  %s8 = ssub.s32 1, %s6
  %s9 = scalar_select 0, %s8, %s6
  $region1: #{tpu_custom_call.1} parent=0
    #allocation3 [shape = 'u8[32768]{0}', space=vmem, size = 0x8000, scoped, tag = 'input window, operand 0, single buffered']
    #allocation4 [shape = 's32[1]{0}', space=sflag, size = 0x4, scoped, tag = 'scoped memory for tpu_custom_call.1']
    #allocation5 [shape = 's32[1]{0}', space=sflag, size = 0x4, scoped, tag = 'scoped memory for tpu_custom_call.1']
    #allocation6 [shape = 'u8[32768]{0}', space=vmem, size = 0x8000, scoped, tag = 'input window, operand 1, single buffered']
    #allocation7 [shape = 's32[1]{0}', space=sflag, size = 0x4, scoped, tag = 'scoped memory for tpu_custom_call.1']
    #allocation8 [shape = 'u8[32768]{0}', space=vmem, size = 0x8000, scoped, tag = 'input window, operand 2, single buffered']
    #allocation9 [shape = 'u8[65536]{0}', space=vmem, size = 0x10000, scoped, tag = 'input window, operand 3, single buffered']
    #allocation10 [shape = 's32[1]{0}', space=sflag, size = 0x4, scoped, tag = 'scoped memory for tpu_custom_call.1']
    #allocation11 [shape = 'u8[65536]{0}', space=vmem, size = 0x10000, scoped, tag = 'output window, operand 0, single buffered']
    %10 = vsyncpa [#allocation4], 0
    %11 = vsyncpa [#allocation7], 0
    %12 = vsyncpa [#allocation10], 0
    %13 = vsyncpa [#allocation5], 0
    // Predicated region
    $region2: #{tpu_custom_call.1} parent=1 // pred_check
      _
    $region3: #{tpu_custom_call.1} parent=1 // pred_check_branch
      %15 = sbr.rel (0) target = $region5
    $region4: #{tpu_custom_call.1} parent=1 // pred_region
      %s17 = ssub.s32 1024, 1024
      %18 = vsyncadd [#allocation4], %s17
      %s19 = sshll.u32 [#allocation3], 4
      %s20 = int_to_ptr.vmem [resolvable:$true] %s19
      %25 = dma.hbm_to_vmem [thread:$0]  %s0, 1024, %s20, [#allocation4], 64, 64, 4
    $region5: #{tpu_custom_call.1} parent=1 // pred_fallthru
      _
    // Predicated region
    $region6: #{tpu_custom_call.1} parent=1 // pred_check
      _
    $region7: #{tpu_custom_call.1} parent=1 // pred_check_branch
      %27 = sbr.rel (0) target = $region9
    $region8: #{tpu_custom_call.1} parent=1 // pred_region
      %s29 = ssub.s32 1024, 1024
      %30 = vsyncadd [#allocation7], %s29
      %s31 = sshll.u32 [#allocation6], 4
      %s32 = int_to_ptr.vmem [resolvable:$true] %s31
      %37 = dma.hbm_to_vmem [thread:$0]  %s1, 1024, %s32, [#allocation7], 64, 64, 4
    $region9: #{tpu_custom_call.1} parent=1 // pred_fallthru
      _
    // Predicated region
    $region10: #{tpu_custom_call.1} parent=1 // pred_check
      _
    $region11: #{tpu_custom_call.1} parent=1 // pred_check_branch
      %39 = sbr.rel (0) target = $region13
    $region12: #{tpu_custom_call.1} parent=1 // pred_region
      %s41 = ssub.s32 1024, 1024
      %42 = vsyncadd [#allocation7], %s41
      %s43 = sshll.u32 [#allocation8], 4
      %s44 = int_to_ptr.vmem [resolvable:$true] %s43
      %49 = dma.hbm_to_vmem [thread:$0]  %s2, 1024, %s44, [#allocation7], 64, 64, 4
    $region13: #{tpu_custom_call.1} parent=1 // pred_fallthru
      _
    // Predicated region
    $region14: #{tpu_custom_call.1} parent=1 // pred_check
      _
    $region15: #{tpu_custom_call.1} parent=1 // pred_check_branch
      %51 = sbr.rel (0) target = $region17
    $region16: #{tpu_custom_call.1} parent=1 // pred_region
      %s53 = ssub.s32 2048, 2048
      %54 = vsyncadd [#allocation10], %s53
      %s55 = sshll.u32 [#allocation9], 4
      %s56 = int_to_ptr.vmem [resolvable:$true] %s55
      %61 = dma.hbm_to_vmem [thread:$0]  %s3, 2048, %s56, [#allocation10], 64, 64, 4
    $region17: #{tpu_custom_call.1} parent=1 // pred_fallthru
      _
    // Predicated region
    $region18: #{tpu_custom_call.1} parent=1 // pred_check
      _
    $region19: #{tpu_custom_call.1} parent=1 // pred_check_branch
      %63 = sbr.rel (0) target = $region21
    $region20: #{tpu_custom_call.1} parent=1 // pred_region
      _
    $region21: #{tpu_custom_call.1} parent=1 // pred_fallthru
      _
    // Predicated region
    $region22: #{tpu_custom_call.1} parent=1 // pred_check
      _
    $region23: #{tpu_custom_call.1} parent=1 // pred_check_branch
      %65 = sbr.rel (0) target = $region25
    $region24: #{tpu_custom_call.1} parent=1 // pred_region
      %66 = dma.done [#allocation4], 1024
    $region25: #{tpu_custom_call.1} parent=1 // pred_fallthru
      _
    // Predicated region
    $region26: #{tpu_custom_call.1} parent=1 // pred_check
      _
    $region27: #{tpu_custom_call.1} parent=1 // pred_check_branch
      %68 = sbr.rel (0) target = $region29
    $region28: #{tpu_custom_call.1} parent=1 // pred_region
      %69 = dma.done [#allocation7], 1024
    $region29: #{tpu_custom_call.1} parent=1 // pred_fallthru
      _
    // Predicated region
    $region30: #{tpu_custom_call.1} parent=1 // pred_check
      _
    $region31: #{tpu_custom_call.1} parent=1 // pred_check_branch
      %71 = sbr.rel (0) target = $region33
    $region32: #{tpu_custom_call.1} parent=1 // pred_region
      %72 = dma.done [#allocation7], 1024
    $region33: #{tpu_custom_call.1} parent=1 // pred_fallthru
      _
    // Predicated region
    $region34: #{tpu_custom_call.1} parent=1 // pred_check
      _
    $region35: #{tpu_custom_call.1} parent=1 // pred_check_branch
      %74 = sbr.rel (0) target = $region37
    $region36: #{tpu_custom_call.1} parent=1 // pred_region
      %75 = dma.done [#allocation10], 2048
    $region37: #{tpu_custom_call.1} parent=1 // pred_fallthru
      _
    %p77 = scmp.eq.s32.totalorder 0, 0
    // Predicated region
    $region38: #{tpu_custom_call.1} parent=1 // pred_check
      %p78 = pneg %p77
    $region39: #{tpu_custom_call.1} parent=1 // pred_check_branch
      %80 = sbr.rel (%p78) target = $region41
    $region40: #{tpu_custom_call.1} parent=1 // pred_region
      %81 = vst [vmem:[#allocation2] sm:$0xff] 0.0
      %82 = vst [vmem:[#allocation2 + $0x8] sm:$0xff] 0.0
      %83 = vst [vmem:[#allocation2 + $0x10] sm:$0xff] 0.0
      %84 = vst [vmem:[#allocation2 + $0x18] sm:$0xff] 0.0
      %85 = vst [vmem:[#allocation2 + $0x20] sm:$0xff] 0.0
      %86 = vst [vmem:[#allocation2 + $0x28] sm:$0xff] 0.0
      %87 = vst [vmem:[#allocation2 + $0x30] sm:$0xff] 0.0
      %88 = vst [vmem:[#allocation2 + $0x38] sm:$0xff] 0.0
      %89 = vst [vmem:[#allocation2 + $0x40] sm:$0xff] 0.0
      %90 = vst [vmem:[#allocation2 + $0x48] sm:$0xff] 0.0
      %91 = vst [vmem:[#allocation2 + $0x50] sm:$0xff] 0.0
      %92 = vst [vmem:[#allocation2 + $0x58] sm:$0xff] 0.0
      %93 = vst [vmem:[#allocation2 + $0x60] sm:$0xff] 0.0
      %94 = vst [vmem:[#allocation2 + $0x68] sm:$0xff] 0.0
      %95 = vst [vmem:[#allocation2 + $0x70] sm:$0xff] 0.0
      %96 = vst [vmem:[#allocation2 + $0x78] sm:$0xff] 0.0
    $region41: #{tpu_custom_call.1} parent=1 // pred_fallthru
      _
    %v97 = vld [vmem:[#allocation2] sm:$0xff]
    %v98 = vld [vmem:[#allocation2 + $0x8] sm:$0xff]
    %v99 = vld [vmem:[#allocation2 + $0x10] sm:$0xff]
    %v100 = vld [vmem:[#allocation2 + $0x18] sm:$0xff]
    %v101 = vld [vmem:[#allocation2 + $0x20] sm:$0xff]
    %v102 = vld [vmem:[#allocation2 + $0x28] sm:$0xff]
    %v103 = vld [vmem:[#allocation2 + $0x30] sm:$0xff]
    %v104 = vld [vmem:[#allocation2 + $0x38] sm:$0xff]
    %v105 = vld [vmem:[#allocation2 + $0x40] sm:$0xff]
    %v106 = vld [vmem:[#allocation2 + $0x48] sm:$0xff]
    %v107 = vld [vmem:[#allocation2 + $0x50] sm:$0xff]
    %v108 = vld [vmem:[#allocation2 + $0x58] sm:$0xff]
    %v109 = vld [vmem:[#allocation2 + $0x60] sm:$0xff]
    %v110 = vld [vmem:[#allocation2 + $0x68] sm:$0xff]
    %v111 = vld [vmem:[#allocation2 + $0x70] sm:$0xff]
    %v112 = vld [vmem:[#allocation2 + $0x78] sm:$0xff]
    %v113 = vld [vmem:[#allocation3] sm:$0xf]
    %v114 = vld [vmem:[#allocation3 + $0x4] sm:$0xf]
    %v115 = vld [vmem:[#allocation3 + $0x8] sm:$0xf]
    %v116 = vld [vmem:[#allocation3 + $0xc] sm:$0xf]
    %v117 = vld [vmem:[#allocation3 + $0x10] sm:$0xf]
    %v118 = vld [vmem:[#allocation3 + $0x14] sm:$0xf]
    %v119 = vld [vmem:[#allocation3 + $0x18] sm:$0xf]
    %v120 = vld [vmem:[#allocation3 + $0x1c] sm:$0xf]
    %v121 = vld [vmem:[#allocation3 + $0x20] sm:$0xf]
    %v122 = vld [vmem:[#allocation3 + $0x24] sm:$0xf]
    %v123 = vld [vmem:[#allocation3 + $0x28] sm:$0xf]
    %v124 = vld [vmem:[#allocation3 + $0x2c] sm:$0xf]
    %v125 = vld [vmem:[#allocation3 + $0x30] sm:$0xf]
    %v126 = vld [vmem:[#allocation3 + $0x34] sm:$0xf]
    %v127 = vld [vmem:[#allocation3 + $0x38] sm:$0xf]
    %v128 = vld [vmem:[#allocation3 + $0x3c] sm:$0xf]
    %v129 = vld [vmem:[#allocation6] sm:$0xf]
    %v130 = vld [vmem:[#allocation6 + $0x4] sm:$0xf]
    %v131 = vld [vmem:[#allocation6 + $0x8] sm:$0xf]
    %v132 = vld [vmem:[#allocation6 + $0xc] sm:$0xf]
    %v133 = vld [vmem:[#allocation6 + $0x10] sm:$0xf]
    %v134 = vld [vmem:[#allocation6 + $0x14] sm:$0xf]
    %v135 = vld [vmem:[#allocation6 + $0x18] sm:$0xf]
    %v136 = vld [vmem:[#allocation6 + $0x1c] sm:$0xf]
    %v137 = vld [vmem:[#allocation6 + $0x20] sm:$0xf]
    %v138 = vld [vmem:[#allocation6 + $0x24] sm:$0xf]
    %v139 = vld [vmem:[#allocation6 + $0x28] sm:$0xf]
    %v140 = vld [vmem:[#allocation6 + $0x2c] sm:$0xf]
    %v141 = vld [vmem:[#allocation6 + $0x30] sm:$0xf]
    %v142 = vld [vmem:[#allocation6 + $0x34] sm:$0xf]
    %v143 = vld [vmem:[#allocation6 + $0x38] sm:$0xf]
    %v144 = vld [vmem:[#allocation6 + $0x3c] sm:$0xf]
    %v161 = vunpack.c.l.b16 %v113
    %v162 = vunpack.c.l.b16 %v114
    %v163 = vunpack.c.l.b16 %v115
    %v164 = vunpack.c.l.b16 %v116
    %v165 = vunpack.c.l.b16 %v117
    %v166 = vunpack.c.l.b16 %v118
    %v167 = vunpack.c.l.b16 %v119
    %v168 = vunpack.c.l.b16 %v120
    %v169 = vunpack.c.l.b16 %v121
    %v170 = vunpack.c.l.b16 %v122
    %v171 = vunpack.c.l.b16 %v123
    %v172 = vunpack.c.l.b16 %v124
    %v173 = vunpack.c.l.b16 %v125
    %v174 = vunpack.c.l.b16 %v126
    %v175 = vunpack.c.l.b16 %v127
    %v176 = vunpack.c.l.b16 %v128
    %v177 = vpack.c.b16 %v162, %v161
    %v178 = vpack.c.b16 %v164, %v163
    %v179 = vpack.c.b16 %v166, %v165
    %v180 = vpack.c.b16 %v168, %v167
    %v181 = vpack.c.b16 %v170, %v169
    %v182 = vpack.c.b16 %v172, %v171
    %v183 = vpack.c.b16 %v174, %v173
    %v184 = vpack.c.b16 %v176, %v175
    %v209 = vunpack.c.l.b16 %v129
    %v210 = vunpack.c.l.b16 %v130
    %v211 = vunpack.c.l.b16 %v131
    %v212 = vunpack.c.l.b16 %v132
    %v213 = vunpack.c.l.b16 %v133
    %v214 = vunpack.c.l.b16 %v134
    %v215 = vunpack.c.l.b16 %v135
    %v216 = vunpack.c.l.b16 %v136
    %v217 = vunpack.c.l.b16 %v137
    %v218 = vunpack.c.l.b16 %v138
    %v219 = vunpack.c.l.b16 %v139
    %v220 = vunpack.c.l.b16 %v140
    %v221 = vunpack.c.l.b16 %v141
    %v222 = vunpack.c.l.b16 %v142
    %v223 = vunpack.c.l.b16 %v143
    %v224 = vunpack.c.l.b16 %v144
    %v225 = vpack.c.b16 %v210, %v209
    %v226 = vpack.c.b16 %v212, %v211
    %v227 = vpack.c.b16 %v214, %v213
    %v228 = vpack.c.b16 %v216, %v215
    %v229 = vpack.c.b16 %v218, %v217
    %v230 = vpack.c.b16 %v220, %v219
    %v231 = vpack.c.b16 %v222, %v221
    %v232 = vpack.c.b16 %v224, %v223
    %241 = vmatprep.subr.bf16.mxu0 0
    %242 = vmatpush1.bf16.msra.mxu0 %v225
    %243 = vmatprep.subr.bf16.mxu0 0
    %244 = vmatpush1.bf16.msra.mxu0 %v226
    %245 = vmatprep.subr.bf16.mxu0 0
    %246 = vmatpush1.bf16.msra.mxu0 %v227
    %247 = vmatprep.subr.bf16.mxu0 0
    %248 = vmatpush1.bf16.msra.mxu0 %v228
    %249 = vmatprep.subr.bf16.mxu0 0
    %250 = vmatpush1.bf16.msra.mxu0 %v229
    %251 = vmatprep.subr.bf16.mxu0 0
    %252 = vmatpush1.bf16.msra.mxu0 %v230
    %253 = vmatprep.subr.bf16.mxu0 0
    %254 = vmatpush1.bf16.msra.mxu0 %v231
    %255 = vmatprep.subr.bf16.mxu0 0
    %256 = vmatpush1.bf16.msra.mxu0 %v232
    %257 = vmatprep.subr.bf16.mxu0 0
    %258 = vmatpush1.bf16.msra.mxu0 0
    %259 = vmatprep.subr.bf16.mxu0 0
    %260 = vmatpush1.bf16.msra.mxu0 0
    %261 = vmatprep.subr.bf16.mxu0 0
    %262 = vmatpush1.bf16.msra.mxu0 0
    %263 = vmatprep.subr.bf16.mxu0 0
    %264 = vmatpush1.bf16.msra.mxu0 0
    %265 = vmatprep.subr.bf16.mxu0 0
    %266 = vmatpush1.bf16.msra.mxu0 0
    %267 = vmatprep.subr.bf16.mxu0 0
    %268 = vmatpush1.bf16.msra.mxu0 0
    %269 = vmatprep.subr.bf16.mxu0 0
    %270 = vmatpush1.bf16.msra.mxu0 0
    %271 = vmatprep.subr.bf16.mxu0 0
    %272 = vmatpush1.bf16.msra.mxu0 0
    %273 = vmatprep.mubr.bf16.mxu0 0
    %274 = vmatmul.mubr.bf16.gmra.mrb[0].mxu0 %v177
    %v275 = vpop.f32.mrb[0].mxu0
    %v276 = vadd.f32 0.0, %v275
    %v277 = vpop.f32.mrb[0].mxu0
    %v278 = vpop.f32.mrb[0].mxu0
    %v279 = vadd.f32 0.0, %v278
    %v280 = vpop.f32.mrb[0].mxu0
    %281 = vmatprep.mubr.bf16.mxu0 0
    %282 = vmatmul.mubr.bf16.gmra.mrb[0].mxu0 %v178
    %v283 = vpop.f32.mrb[0].mxu0
    %v284 = vadd.f32 0.0, %v283
    %v285 = vpop.f32.mrb[0].mxu0
    %v286 = vpop.f32.mrb[0].mxu0
    %v287 = vadd.f32 0.0, %v286
    %v288 = vpop.f32.mrb[0].mxu0
    %289 = vmatprep.mubr.bf16.mxu0 0
    %290 = vmatmul.mubr.bf16.gmra.mrb[0].mxu0 %v179
    %v291 = vpop.f32.mrb[0].mxu0
    %v292 = vadd.f32 0.0, %v291
    %v293 = vpop.f32.mrb[0].mxu0
    %v294 = vpop.f32.mrb[0].mxu0
    %v295 = vadd.f32 0.0, %v294
    %v296 = vpop.f32.mrb[0].mxu0
    %297 = vmatprep.mubr.bf16.mxu0 0
    %298 = vmatmul.mubr.bf16.gmra.mrb[0].mxu0 %v180
    %v299 = vpop.f32.mrb[0].mxu0
    %v300 = vadd.f32 0.0, %v299
    %v301 = vpop.f32.mrb[0].mxu0
    %v302 = vpop.f32.mrb[0].mxu0
    %v303 = vadd.f32 0.0, %v302
    %v304 = vpop.f32.mrb[0].mxu0
    %305 = vmatprep.mubr.bf16.mxu0 0
    %306 = vmatmul.mubr.bf16.gmra.mrb[0].mxu0 %v181
    %v307 = vpop.f32.mrb[0].mxu0
    %v308 = vadd.f32 0.0, %v307
    %v309 = vpop.f32.mrb[0].mxu0
    %v310 = vpop.f32.mrb[0].mxu0
    %v311 = vadd.f32 0.0, %v310
    %v312 = vpop.f32.mrb[0].mxu0
    %313 = vmatprep.mubr.bf16.mxu0 0
    %314 = vmatmul.mubr.bf16.gmra.mrb[0].mxu0 %v182
    %v315 = vpop.f32.mrb[0].mxu0
    %v316 = vadd.f32 0.0, %v315
    %v317 = vpop.f32.mrb[0].mxu0
    %v318 = vpop.f32.mrb[0].mxu0
    %v319 = vadd.f32 0.0, %v318
    %v320 = vpop.f32.mrb[0].mxu0
    %321 = vmatprep.mubr.bf16.mxu0 0
    %322 = vmatmul.mubr.bf16.gmra.mrb[0].mxu0 %v183
    %v323 = vpop.f32.mrb[0].mxu0
    %v324 = vadd.f32 0.0, %v323
    %v325 = vpop.f32.mrb[0].mxu0
    %v326 = vpop.f32.mrb[0].mxu0
    %v327 = vadd.f32 0.0, %v326
    %v328 = vpop.f32.mrb[0].mxu0
    %329 = vmatprep.mubr.bf16.mxu0 0
    %330 = vmatmul.mubr.bf16.gmra.mrb[0].mxu0 %v184
    %v331 = vpop.f32.mrb[0].mxu0
    %v332 = vadd.f32 0.0, %v331
    %v333 = vpop.f32.mrb[0].mxu0
    %v334 = vpop.f32.mrb[0].mxu0
    %v335 = vadd.f32 0.0, %v334
    %v336 = vpop.f32.mrb[0].mxu0
    %337 = vdwg.mxu0
    %v338 = vadd.f32 %v97, %v276
    %v339 = vadd.f32 %v98, %v279
    %v340 = vadd.f32 %v99, %v284
    %v341 = vadd.f32 %v100, %v287
    %v342 = vadd.f32 %v101, %v292
    %v343 = vadd.f32 %v102, %v295
    %v344 = vadd.f32 %v103, %v300
    %v345 = vadd.f32 %v104, %v303
    %v346 = vadd.f32 %v105, %v308
    %v347 = vadd.f32 %v106, %v311
    %v348 = vadd.f32 %v107, %v316
    %v349 = vadd.f32 %v108, %v319
    %v350 = vadd.f32 %v109, %v324
    %v351 = vadd.f32 %v110, %v327
    %v352 = vadd.f32 %v111, %v332
    %v353 = vadd.f32 %v112, %v335
    %354 = vst [vmem:[#allocation2] sm:$0xff] %v338
    %355 = vst [vmem:[#allocation2 + $0x8] sm:$0xff] %v339
    %356 = vst [vmem:[#allocation2 + $0x10] sm:$0xff] %v340
    %357 = vst [vmem:[#allocation2 + $0x18] sm:$0xff] %v341
    %358 = vst [vmem:[#allocation2 + $0x20] sm:$0xff] %v342
    %359 = vst [vmem:[#allocation2 + $0x28] sm:$0xff] %v343
    %360 = vst [vmem:[#allocation2 + $0x30] sm:$0xff] %v344
    %361 = vst [vmem:[#allocation2 + $0x38] sm:$0xff] %v345
    %362 = vst [vmem:[#allocation2 + $0x40] sm:$0xff] %v346
    %363 = vst [vmem:[#allocation2 + $0x48] sm:$0xff] %v347
    %364 = vst [vmem:[#allocation2 + $0x50] sm:$0xff] %v348
    %365 = vst [vmem:[#allocation2 + $0x58] sm:$0xff] %v349
    %366 = vst [vmem:[#allocation2 + $0x60] sm:$0xff] %v350
    %367 = vst [vmem:[#allocation2 + $0x68] sm:$0xff] %v351
    %368 = vst [vmem:[#allocation2 + $0x70] sm:$0xff] %v352
    %369 = vst [vmem:[#allocation2 + $0x78] sm:$0xff] %v353
    // Predicated region
    $region42: #{tpu_custom_call.1} parent=1 // pred_check
      %p370 = pneg %p77
    $region43: #{tpu_custom_call.1} parent=1 // pred_check_branch
      %372 = sbr.rel (%p370) target = $region45
    $region44: #{tpu_custom_call.1} parent=1 // pred_region
      %v373 = vld [vmem:[#allocation2] sm:$0xff]
      %v374 = vld [vmem:[#allocation2 + $0x8] sm:$0xff]
      %v375 = vld [vmem:[#allocation2 + $0x10] sm:$0xff]
      %v376 = vld [vmem:[#allocation2 + $0x18] sm:$0xff]
      %v377 = vld [vmem:[#allocation2 + $0x20] sm:$0xff]
      %v378 = vld [vmem:[#allocation2 + $0x28] sm:$0xff]
      %v379 = vld [vmem:[#allocation2 + $0x30] sm:$0xff]
      %v380 = vld [vmem:[#allocation2 + $0x38] sm:$0xff]
      %v381 = vld [vmem:[#allocation2 + $0x40] sm:$0xff]
      %v382 = vld [vmem:[#allocation2 + $0x48] sm:$0xff]
      %v383 = vld [vmem:[#allocation2 + $0x50] sm:$0xff]
      %v384 = vld [vmem:[#allocation2 + $0x58] sm:$0xff]
      %v385 = vld [vmem:[#allocation2 + $0x60] sm:$0xff]
      %v386 = vld [vmem:[#allocation2 + $0x68] sm:$0xff]
      %v387 = vld [vmem:[#allocation2 + $0x70] sm:$0xff]
      %v388 = vld [vmem:[#allocation2 + $0x78] sm:$0xff]
      %v389 = vpack.c.bf16 %v374, %v373
      %v390 = vpack.c.bf16 %v376, %v375
      %v391 = vpack.c.bf16 %v378, %v377
      %v392 = vpack.c.bf16 %v380, %v379
      %v393 = vpack.c.bf16 %v382, %v381
      %v394 = vpack.c.bf16 %v384, %v383
      %v395 = vpack.c.bf16 %v386, %v385
      %v396 = vpack.c.bf16 %v388, %v387
      %v397 = vld [vmem:[#allocation8] sm:$0xf]
      %v398 = vld [vmem:[#allocation8 + $0x4] sm:$0xf]
      %v399 = vld [vmem:[#allocation8 + $0x8] sm:$0xf]
      %v400 = vld [vmem:[#allocation8 + $0xc] sm:$0xf]
      %v401 = vld [vmem:[#allocation8 + $0x10] sm:$0xf]
      %v402 = vld [vmem:[#allocation8 + $0x14] sm:$0xf]
      %v403 = vld [vmem:[#allocation8 + $0x18] sm:$0xf]
      %v404 = vld [vmem:[#allocation8 + $0x1c] sm:$0xf]
      %v405 = vld [vmem:[#allocation8 + $0x20] sm:$0xf]
      %v406 = vld [vmem:[#allocation8 + $0x24] sm:$0xf]
      %v407 = vld [vmem:[#allocation8 + $0x28] sm:$0xf]
      %v408 = vld [vmem:[#allocation8 + $0x2c] sm:$0xf]
      %v409 = vld [vmem:[#allocation8 + $0x30] sm:$0xf]
      %v410 = vld [vmem:[#allocation8 + $0x34] sm:$0xf]
      %v411 = vld [vmem:[#allocation8 + $0x38] sm:$0xf]
      %v412 = vld [vmem:[#allocation8 + $0x3c] sm:$0xf]
      %v429 = vunpack.c.l.b16 %v397
      %v430 = vunpack.c.l.b16 %v398
      %v431 = vunpack.c.l.b16 %v399
      %v432 = vunpack.c.l.b16 %v400
      %v433 = vunpack.c.l.b16 %v401
      %v434 = vunpack.c.l.b16 %v402
      %v435 = vunpack.c.l.b16 %v403
      %v436 = vunpack.c.l.b16 %v404
      %v437 = vunpack.c.l.b16 %v405
      %v438 = vunpack.c.l.b16 %v406
      %v439 = vunpack.c.l.b16 %v407
      %v440 = vunpack.c.l.b16 %v408
      %v441 = vunpack.c.l.b16 %v409
      %v442 = vunpack.c.l.b16 %v410
      %v443 = vunpack.c.l.b16 %v411
      %v444 = vunpack.c.l.b16 %v412
      %v445 = vpack.c.b16 %v430, %v429
      %v446 = vpack.c.b16 %v432, %v431
      %v447 = vpack.c.b16 %v434, %v433
      %v448 = vpack.c.b16 %v436, %v435
      %v449 = vpack.c.b16 %v438, %v437
      %v450 = vpack.c.b16 %v440, %v439
      %v451 = vpack.c.b16 %v442, %v441
      %v452 = vpack.c.b16 %v444, %v443
      %v461 = vld [vmem:[#allocation9] sm:$0xf]
      %v462 = vld [vmem:[#allocation9 + $0x4] sm:$0xf]
      %v463 = vld [vmem:[#allocation9 + $0x8] sm:$0xf]
      %v464 = vld [vmem:[#allocation9 + $0xc] sm:$0xf]
      %v465 = vld [vmem:[#allocation9 + $0x10] sm:$0xf]
      %v466 = vld [vmem:[#allocation9 + $0x14] sm:$0xf]
      %v467 = vld [vmem:[#allocation9 + $0x18] sm:$0xf]
      %v468 = vld [vmem:[#allocation9 + $0x1c] sm:$0xf]
      %v469 = vld [vmem:[#allocation9 + $0x20] sm:$0xf]
      %v470 = vld [vmem:[#allocation9 + $0x24] sm:$0xf]
      %v471 = vld [vmem:[#allocation9 + $0x28] sm:$0xf]
      %v472 = vld [vmem:[#allocation9 + $0x2c] sm:$0xf]
      %v473 = vld [vmem:[#allocation9 + $0x30] sm:$0xf]
      %v474 = vld [vmem:[#allocation9 + $0x34] sm:$0xf]
      %v475 = vld [vmem:[#allocation9 + $0x38] sm:$0xf]
      %v476 = vld [vmem:[#allocation9 + $0x3c] sm:$0xf]
      %v477 = vld [vmem:[#allocation9 + $0x40] sm:$0xf]
      %v478 = vld [vmem:[#allocation9 + $0x44] sm:$0xf]
      %v479 = vld [vmem:[#allocation9 + $0x48] sm:$0xf]
      %v480 = vld [vmem:[#allocation9 + $0x4c] sm:$0xf]
      %v481 = vld [vmem:[#allocation9 + $0x50] sm:$0xf]
      %v482 = vld [vmem:[#allocation9 + $0x54] sm:$0xf]
      %v483 = vld [vmem:[#allocation9 + $0x58] sm:$0xf]
      %v484 = vld [vmem:[#allocation9 + $0x5c] sm:$0xf]
      %v485 = vld [vmem:[#allocation9 + $0x60] sm:$0xf]
      %v486 = vld [vmem:[#allocation9 + $0x64] sm:$0xf]
      %v487 = vld [vmem:[#allocation9 + $0x68] sm:$0xf]
      %v488 = vld [vmem:[#allocation9 + $0x6c] sm:$0xf]
      %v489 = vld [vmem:[#allocation9 + $0x70] sm:$0xf]
      %v490 = vld [vmem:[#allocation9 + $0x74] sm:$0xf]
      %v491 = vld [vmem:[#allocation9 + $0x78] sm:$0xf]
      %v492 = vld [vmem:[#allocation9 + $0x7c] sm:$0xf]
      %v493 = vld [vmem:[%s4] sm:$0x1]
      %v495 = vlaneseq
      %v496 = vshrl.u32 %v495, 7
      %v497 = vsub.s32 0, %v496
      %v498 = vrot.slane %v493, %v497
      %v532 = vunpack.c.l.b16 %v461
      %v533 = vunpack.c.l.b16 %v462
      %v534 = vunpack.c.l.b16 %v463
      %v535 = vunpack.c.l.b16 %v464
      %v536 = vunpack.c.l.b16 %v465
      %v537 = vunpack.c.l.b16 %v466
      %v538 = vunpack.c.l.b16 %v467
      %v539 = vunpack.c.l.b16 %v468
      %v540 = vunpack.c.l.b16 %v469
      %v541 = vunpack.c.l.b16 %v470
      %v542 = vunpack.c.l.b16 %v471
      %v543 = vunpack.c.l.b16 %v472
      %v544 = vunpack.c.l.b16 %v473
      %v545 = vunpack.c.l.b16 %v474
      %v546 = vunpack.c.l.b16 %v475
      %v547 = vunpack.c.l.b16 %v476
      %v548 = vunpack.c.l.b16 %v477
      %v549 = vunpack.c.l.b16 %v478
      %v550 = vunpack.c.l.b16 %v479
      %v551 = vunpack.c.l.b16 %v480
      %v552 = vunpack.c.l.b16 %v481
      %v553 = vunpack.c.l.b16 %v482
      %v554 = vunpack.c.l.b16 %v483
      %v555 = vunpack.c.l.b16 %v484
      %v556 = vunpack.c.l.b16 %v485
      %v557 = vunpack.c.l.b16 %v486
      %v558 = vunpack.c.l.b16 %v487
      %v559 = vunpack.c.l.b16 %v488
      %v560 = vunpack.c.l.b16 %v489
      %v561 = vunpack.c.l.b16 %v490
      %v562 = vunpack.c.l.b16 %v491
      %v563 = vunpack.c.l.b16 %v492
      %v564 = vpack.c.b16 %v533, %v532
      %v565 = vpack.c.b16 %v535, %v534
      %v566 = vpack.c.b16 %v537, %v536
      %v567 = vpack.c.b16 %v539, %v538
      %v568 = vpack.c.b16 %v541, %v540
      %v569 = vpack.c.b16 %v543, %v542
      %v570 = vpack.c.b16 %v545, %v544
      %v571 = vpack.c.b16 %v547, %v546
      %v572 = vpack.c.b16 %v549, %v548
      %v573 = vpack.c.b16 %v551, %v550
      %v574 = vpack.c.b16 %v553, %v552
      %v575 = vpack.c.b16 %v555, %v554
      %v576 = vpack.c.b16 %v557, %v556
      %v577 = vpack.c.b16 %v559, %v558
      %v578 = vpack.c.b16 %v561, %v560
      %v579 = vpack.c.b16 %v563, %v562
      %596 = vmatprep.subr.bf16.mxu0 0
      %597 = vmatpush1.bf16.msra.mxu0 %v564
      %598 = vmatprep.subr.bf16.mxu0 0
      %599 = vmatpush1.bf16.msra.mxu0 %v565
      %600 = vmatprep.subr.bf16.mxu0 0
      %601 = vmatpush1.bf16.msra.mxu0 %v566
      %602 = vmatprep.subr.bf16.mxu0 0
      %603 = vmatpush1.bf16.msra.mxu0 %v567
      %604 = vmatprep.subr.bf16.mxu0 0
      %605 = vmatpush1.bf16.msra.mxu0 %v568
      %606 = vmatprep.subr.bf16.mxu0 0
      %607 = vmatpush1.bf16.msra.mxu0 %v569
      %608 = vmatprep.subr.bf16.mxu0 0
      %609 = vmatpush1.bf16.msra.mxu0 %v570
      %610 = vmatprep.subr.bf16.mxu0 0
      %611 = vmatpush1.bf16.msra.mxu0 %v571
      %612 = vmatprep.subr.bf16.mxu0 0
      %613 = vmatpush1.bf16.msra.mxu0 %v572
      %614 = vmatprep.subr.bf16.mxu0 0
      %615 = vmatpush1.bf16.msra.mxu0 %v573
      %616 = vmatprep.subr.bf16.mxu0 0
      %617 = vmatpush1.bf16.msra.mxu0 %v574
      %618 = vmatprep.subr.bf16.mxu0 0
      %619 = vmatpush1.bf16.msra.mxu0 %v575
      %620 = vmatprep.subr.bf16.mxu0 0
      %621 = vmatpush1.bf16.msra.mxu0 %v576
      %622 = vmatprep.subr.bf16.mxu0 0
      %623 = vmatpush1.bf16.msra.mxu0 %v577
      %624 = vmatprep.subr.bf16.mxu0 0
      %625 = vmatpush1.bf16.msra.mxu0 %v578
      %626 = vmatprep.subr.bf16.mxu0 0
      %627 = vmatpush1.bf16.msra.mxu0 %v579
      %628 = vmatprep.mubr.bf16.mxu0 %v445
      %629 = vmatmul.mubr.bf16.gmra.mrb[0].mxu0 %v389
      %v630 = vpop.f32.mrb[0].mxu0
      %v631 = vadd.f32 %v498, %v630
      %v632 = vpop.f32.mrb[0].mxu0
      %v633 = vpop.f32.mrb[0].mxu0
      %v634 = vadd.f32 %v498, %v633
      %v635 = vpop.f32.mrb[0].mxu0
      %636 = vmatprep.mubr.bf16.mxu0 %v446
      %637 = vmatmul.mubr.bf16.gmra.mrb[0].mxu0 %v390
      %v638 = vpop.f32.mrb[0].mxu0
      %v639 = vadd.f32 %v498, %v638
      %v640 = vpop.f32.mrb[0].mxu0
      %v641 = vpop.f32.mrb[0].mxu0
      %v642 = vadd.f32 %v498, %v641
      %v643 = vpop.f32.mrb[0].mxu0
      %644 = vmatprep.mubr.bf16.mxu0 %v447
      %645 = vmatmul.mubr.bf16.gmra.mrb[0].mxu0 %v391
      %v646 = vpop.f32.mrb[0].mxu0
      %v647 = vadd.f32 %v498, %v646
      %v648 = vpop.f32.mrb[0].mxu0
      %v649 = vpop.f32.mrb[0].mxu0
      %v650 = vadd.f32 %v498, %v649
      %v651 = vpop.f32.mrb[0].mxu0
      %652 = vmatprep.mubr.bf16.mxu0 %v448
      %653 = vmatmul.mubr.bf16.gmra.mrb[0].mxu0 %v392
      %v654 = vpop.f32.mrb[0].mxu0
      %v655 = vadd.f32 %v498, %v654
      %v656 = vpop.f32.mrb[0].mxu0
      %v657 = vpop.f32.mrb[0].mxu0
      %v658 = vadd.f32 %v498, %v657
      %v659 = vpop.f32.mrb[0].mxu0
      %660 = vmatprep.mubr.bf16.mxu0 %v449
      %661 = vmatmul.mubr.bf16.gmra.mrb[0].mxu0 %v393
      %v662 = vpop.f32.mrb[0].mxu0
      %v663 = vadd.f32 %v498, %v662
      %v664 = vpop.f32.mrb[0].mxu0
      %v665 = vpop.f32.mrb[0].mxu0
      %v666 = vadd.f32 %v498, %v665
      %v667 = vpop.f32.mrb[0].mxu0
      %668 = vmatprep.mubr.bf16.mxu0 %v450
      %669 = vmatmul.mubr.bf16.gmra.mrb[0].mxu0 %v394
      %v670 = vpop.f32.mrb[0].mxu0
      %v671 = vadd.f32 %v498, %v670
      %v672 = vpop.f32.mrb[0].mxu0
      %v673 = vpop.f32.mrb[0].mxu0
      %v674 = vadd.f32 %v498, %v673
      %v675 = vpop.f32.mrb[0].mxu0
      %676 = vmatprep.mubr.bf16.mxu0 %v451
      %677 = vmatmul.mubr.bf16.gmra.mrb[0].mxu0 %v395
      %v678 = vpop.f32.mrb[0].mxu0
      %v679 = vadd.f32 %v498, %v678
      %v680 = vpop.f32.mrb[0].mxu0
      %v681 = vpop.f32.mrb[0].mxu0
      %v682 = vadd.f32 %v498, %v681
      %v683 = vpop.f32.mrb[0].mxu0
      %684 = vmatprep.mubr.bf16.mxu0 %v452
      %685 = vmatmul.mubr.bf16.gmra.mrb[0].mxu0 %v396
      %v686 = vpop.f32.mrb[0].mxu0
      %v687 = vadd.f32 %v498, %v686
      %v688 = vpop.f32.mrb[0].mxu0
      %v689 = vpop.f32.mrb[0].mxu0
      %v690 = vadd.f32 %v498, %v689
      %v691 = vpop.f32.mrb[0].mxu0
      %692 = vdwg.mxu0
      %693 = vst [vmem:[#allocation11] sm:$0xff] %v631
      %694 = vst [vmem:[#allocation11 + $0x8] sm:$0xff] %v634
      %695 = vst [vmem:[#allocation11 + $0x10] sm:$0xff] %v639
      %696 = vst [vmem:[#allocation11 + $0x18] sm:$0xff] %v642
      %697 = vst [vmem:[#allocation11 + $0x20] sm:$0xff] %v647
      %698 = vst [vmem:[#allocation11 + $0x28] sm:$0xff] %v650
      %699 = vst [vmem:[#allocation11 + $0x30] sm:$0xff] %v655
      %700 = vst [vmem:[#allocation11 + $0x38] sm:$0xff] %v658
      %701 = vst [vmem:[#allocation11 + $0x40] sm:$0xff] %v663
      %702 = vst [vmem:[#allocation11 + $0x48] sm:$0xff] %v666
      %703 = vst [vmem:[#allocation11 + $0x50] sm:$0xff] %v671
      %704 = vst [vmem:[#allocation11 + $0x58] sm:$0xff] %v674
      %705 = vst [vmem:[#allocation11 + $0x60] sm:$0xff] %v679
      %706 = vst [vmem:[#allocation11 + $0x68] sm:$0xff] %v682
      %707 = vst [vmem:[#allocation11 + $0x70] sm:$0xff] %v687
      %708 = vst [vmem:[#allocation11 + $0x78] sm:$0xff] %v690
    $region45: #{tpu_custom_call.1} parent=1 // pred_fallthru
      _
    // Predicated region
    $region46: #{tpu_custom_call.1} parent=1 // pred_check
      _
    $region47: #{tpu_custom_call.1} parent=1 // pred_check_branch
      %710 = sbr.rel (0) target = $region49
    $region48: #{tpu_custom_call.1} parent=1 // pred_region
      %s712 = ssub.s32 2048, 2048
      %713 = vsyncadd [#allocation5], %s712
      %s714 = sshll.u32 [#allocation11], 4
      %s715 = int_to_ptr.vmem [resolvable:$true] %s714
      %720 = dma.vmem_to_hbm [thread:$0]  %s715, 2048, %s5, [#allocation5], 128, 128, 8
    $region49: #{tpu_custom_call.1} parent=1 // pred_fallthru
      _
    // Predicated region
    $region50: #{tpu_custom_call.1} parent=1 // pred_check
      _
    $region51: #{tpu_custom_call.1} parent=1 // pred_check_branch
      %722 = sbr.rel (0) target = $region53
    $region52: #{tpu_custom_call.1} parent=1 // pred_region
      %723 = dma.done [#allocation5], 2048
    $region53: #{tpu_custom_call.1} parent=1 // pred_fallthru
      _
    %724 = vsyncpa [#allocation4], 1
    %725 = vsyncpa [#allocation7], 1
    %726 = vsyncpa [#allocation10], 1
    %727 = vsyncpa [#allocation5], 1

</llo_original>
